<compile_context>
chip_gen: v6e
topology: v6e:2x2x1
jax: 0.10.0
libtpu: 0.0.40
codegen_flags: <defaults>
</compile_context>

<pallas_src>
import jax
import jax.numpy as jnp
from jax.experimental import pallas as pl
from jax.experimental.pallas import tpu as pltpu


# ----------------------------- kernel ---------------------------------------

def _add_pe_kernel(x_ref, pe_ref, o_ref):
    # Lane-dense streaming add.  x_ref/o_ref: (tS, W) tiles of x; pe_ref is the
    # matching (tS, W) (or (tS, D)) slice of the f32 sinusoidal table.
    # Add in f32 (no-op for f32 inputs), round once at the store.
    o_ref[...] = (x_ref[...].astype(jnp.float32)
                  + pe_ref[...].astype(jnp.float32)).astype(o_ref.dtype)


# ------------------------- parameter setup (buffer) --------------------------

def make_pe_table(d_model: int, max_len: int = 5000,
                  dtype=jnp.float32) -> jnp.ndarray:
    """Sinusoidal table, shape (max_len, 1, d_model).

    Matches the PyTorch buffer `pe` (after unsqueeze(0).transpose(0, 1))."""
    position = jnp.arange(0, max_len, dtype=jnp.float32)[:, None]        # (L, 1)
    div_term = jnp.exp(
        jnp.arange(0, d_model, 2, dtype=jnp.float32)
        * (-jnp.log(jnp.float32(10000.0)) / d_model)
    )                                                                    # (D/2,)
    angles = position * div_term                                         # (L, D/2)
    pe = jnp.zeros((max_len, d_model), dtype=jnp.float32)
    pe = pe.at[:, 0::2].set(jnp.sin(angles))
    pe = pe.at[:, 1::2].set(jnp.cos(angles))
    return pe[:, None, :].astype(dtype)                                  # (L, 1, D)


# ------------------------------ helpers --------------------------------------

def _round_up(n: int, m: int) -> int:
    return -(-n // m) * m


def _default_target_block_bytes() -> int:
    """Generation-aware per-block budget.

    Resident footprint ~= 6x block (x, pe, out each double-buffered):
      v6e / v7x : 4 MiB blocks -> ~24 MiB resident (32 MiB scoped default)
      v5e & older: 2 MiB blocks -> ~12 MiB resident (16 MiB scoped default)
    """
    try:
        kind = jax.devices()[0].device_kind.lower()
    except Exception:
        return 2 << 20
    if any(tag in kind for tag in ("v2", "v3", "v4", "v5")):
        return 2 << 20
    return 4 << 20


def _choose_seq_tile(S: int, padded_row_bytes: int,
                     target_block_bytes: int) -> int:
    """Largest seq-tile whose (VMEM-padded) block stays under the target."""
    tS = max(8, target_block_bytes // max(padded_row_bytes, 1))
    tS = int(min(S, tS))
    if tS < S:
        tS = max(8, tS - tS % 8)   # keep the sublane dim a multiple of 8
    return tS


# ------------------------------ wrapper --------------------------------------

def positional_encoding(x: jnp.ndarray, pe: jnp.ndarray, *,
                        target_block_bytes: int | None = None,
                        donate_x: bool = False) -> jnp.ndarray:
    """x: (S, B, D); pe: (max_len, 1, D) float32.  Returns x + pe[:S].

    Set donate_x=True only when the caller actually donates x's buffer
    (jax.jit donate_argnums); otherwise XLA inserts a defensive copy and the
    alias is pure loss."""
    S, B, D = x.shape
    if S > pe.shape[0]:
        raise ValueError(f"sequence length {S} exceeds max_len {pe.shape[0]}")
    if target_block_bytes is None:
        target_block_bytes = _default_target_block_bytes()

    itemsize = jnp.dtype(x.dtype).itemsize
    pe_itemsize = jnp.dtype(pe.dtype).itemsize
    aliases = {0: 0} if donate_x else {}

    # Fast path: d_model is lane-aligned, so x viewed as (S, B*D) can be tiled
    # (tS, D) with a batch grid axis.  pe's block index is batch-invariant ->
    # its DMA is elided on consecutive batch steps (read once, not B times).
    if (D % 128 == 0) and (B > 1):
        x2 = x.reshape(S, B * D)
        pe2 = pe[:S].reshape(S, D)                       # keep f32
        padded_row = D * max(itemsize, pe_itemsize)
        tS = _choose_seq_tile(S, padded_row, target_block_bytes)
        cost = pl.CostEstimate(
            flops=S * B * D, transcendentals=0,
            bytes_accessed=2 * S * B * D * itemsize + S * D * pe_itemsize)

        out2 = pl.pallas_call(
            _add_pe_kernel,
            out_shape=jax.ShapeDtypeStruct((S, B * D), x.dtype),
            grid_spec=pltpu.PrefetchScalarGridSpec(
                num_scalar_prefetch=0,
                grid=(pl.cdiv(S, tS), B),                # batch innermost
                in_specs=[
                    pl.BlockSpec((tS, D), lambda i, b: (i, b)),   # x[:, b*D:(b+1)*D]
                    pl.BlockSpec((tS, D), lambda i, b: (i, 0)),   # pe (b-invariant)
                ],
                out_specs=pl.BlockSpec((tS, D), lambda i, b: (i, b)),
            ),
            compiler_params=pltpu.CompilerParams(
                dimension_semantics=("parallel", "parallel")),
            cost_estimate=cost,
            input_output_aliases=aliases,
        )(x2, pe2)
        return out2.reshape(S, B, D)

    # General path (any d_model): fully flattened lane-dense blocks (tS, B*D);
    # last dim equals the full extent so the (8,128) rule is always satisfied,
    # and stores are dense vst (no masked vst.msk from a tiny batch/feature
    # dim).  The pe table is tiled over B once in the wrapper -- trivial extra
    # traffic for small D, and a huge win over the old (tS, B, D) layout.
    W = B * D
    x2 = x.reshape(S, W)
    pe2 = jnp.tile(pe[:S], (1, B, 1)).reshape(S, W)      # keep f32
    padded_row = _round_up(W, 128) * max(itemsize, pe_itemsize)
    tS = _choose_seq_tile(S, padded_row, target_block_bytes)
    cost = pl.CostEstimate(
        flops=S * W, transcendentals=0,
        bytes_accessed=2 * S * W * itemsize + S * W * pe_itemsize)

    out2 = pl.pallas_call(
        _add_pe_kernel,
        out_shape=jax.ShapeDtypeStruct((S, W), x.dtype),
        grid_spec=pltpu.PrefetchScalarGridSpec(
            num_scalar_prefetch=0,
            grid=(pl.cdiv(S, tS),),
            in_specs=[
                pl.BlockSpec((tS, W), lambda i: (i, 0)),
                pl.BlockSpec((tS, W), lambda i: (i, 0)),
            ],
            out_specs=pl.BlockSpec((tS, W), lambda i: (i, 0)),
        ),
        compiler_params=pltpu.CompilerParams(
            dimension_semantics=("parallel",)),
        cost_estimate=cost,
        input_output_aliases=aliases,
    )(x2, pe2)
    return out2.reshape(S, B, D)


def positional_encoding_ref(x: jnp.ndarray, pe: jnp.ndarray) -> jnp.ndarray:
    return (x.astype(jnp.float32) + pe[: x.shape[0]].astype(jnp.float32)
            ).astype(x.dtype)


# ------------------------------- demo ----------------------------------------

if __name__ == "__main__":
    key = jax.random.PRNGKey(0)
    k1, k2, k3 = jax.random.split(key, 3)
    max_len = 128

    # Case 1: lane-aligned fast path (d_model multiple of 128, B > 1).
    S, B, D = 8, 2, 128
    x1 = jax.random.normal(k1, (S, B, D), dtype=jnp.float32)
    pe1 = make_pe_table(D, max_len)
    ref1 = positional_encoding_ref(x1, pe1)
    out1 = positional_encoding(x1, pe1)
    jax.block_until_ready(out1)
    assert out1.shape == (S, B, D)
    assert jnp.allclose(out1, ref1, atol=1e-6, rtol=1e-6)

    # Case 2: general flattened path (small d_model not divisible by 128).
    S2, B2, D2 = 8, 2, 32
    x2 = jax.random.normal(k2, (S2, B2, D2), dtype=jnp.float32)
    pe2 = make_pe_table(D2, max_len)
    ref2 = positional_encoding_ref(x2, pe2)
    out2 = positional_encoding(x2, pe2)
    jax.block_until_ready(out2)
    assert out2.shape == (S2, B2, D2)
    assert jnp.allclose(out2, ref2, atol=1e-6, rtol=1e-6)

    # Case 3: longer sequence, exercises multi-step seq grid / masked tail.
    S3, B3, D3 = 50, 4, 128
    x3 = jax.random.normal(k3, (S3, B3, D3), dtype=jnp.float32)
    pe3 = make_pe_table(D3, max_len)
    ref3 = positional_encoding_ref(x3, pe3)
    out3 = positional_encoding(x3, pe3, target_block_bytes=4096)  # force tiling
    jax.block_until_ready(out3)
    assert out3.shape == (S3, B3, D3)
    assert jnp.allclose(out3, ref3, atol=1e-6, rtol=1e-6)

    print("KERNEL_OK")
</pallas_src>

<mosaic_0001>
module attributes {stable_mosaic.version = 11 : i64} {
  func.func @_add_pe_kernel(%arg0: i32, %arg1: i32, %arg2: memref<8x128xf32, #tpu.memory_space<vmem>>, %arg3: memref<8x128xf32, #tpu.memory_space<vmem>>, %arg4: memref<8x128xf32, #tpu.memory_space<vmem>>) attributes {dimension_semantics = [#tpu.dimension_semantics<parallel>, #tpu.dimension_semantics<parallel>], iteration_bounds = array<i64: 1, 2>, scalar_prefetch = 0 : i64, scratch_operands = 0 : i64, tpu.core_type = #tpu.core_type<tc>, window_params = [{transform_indices = @transform_0, window_bounds = array<i64: 8, 128>}, {transform_indices = @transform_1, window_bounds = array<i64: 8, 128>}, {transform_indices = @transform_2, window_bounds = array<i64: 8, 128>}]} {
    %c0 = arith.constant 0 : index
    %c0_0 = arith.constant 0 : index
    %0 = vector.load %arg2[%c0, %c0_0] : memref<8x128xf32, #tpu.memory_space<vmem>>, vector<8x128xf32>
    %c0_1 = arith.constant 0 : index
    %c0_2 = arith.constant 0 : index
    %1 = vector.load %arg3[%c0_1, %c0_2] : memref<8x128xf32, #tpu.memory_space<vmem>>, vector<8x128xf32>
    %2 = arith.addf %0, %1 : vector<8x128xf32>
    %c0_3 = arith.constant 0 : index
    %c0_4 = arith.constant 0 : index
    %3 = vector.load %arg4[%c0_3, %c0_4] : memref<8x128xf32, #tpu.memory_space<vmem>>, vector<8x128xf32>
    tpu.vector_store %arg4[%c0_3, %c0_4], %2 {strides = array<i32>} : memref<8x128xf32, #tpu.memory_space<vmem>>, vector<8x128xf32>,
    return
  }
  func.func @transform_0(%arg0: i32, %arg1: i32) -> (i32, i32) {
    %c0_i32 = arith.constant 0 : i32
    return %arg0, %arg1 : i32, i32
  }
  func.func @transform_1(%arg0: i32, %arg1: i32) -> (i32, i32) {
    %c0_i32 = arith.constant 0 : i32
    %c0_i32_0 = arith.constant 0 : i32
    return %arg0, %c0_i32 : i32, i32
  }
  func.func @transform_2(%arg0: i32, %arg1: i32) -> (i32, i32) {
    %c0_i32 = arith.constant 0 : i32
    return %arg0, %arg1 : i32, i32
  }
}

</mosaic_0001>

<llo_original>
// kernel: tpu_custom_call.1
$region0: #{tpu_custom_call.1}
  #allocation0 [shape = 'u32[]', space=smem, size = 0x4, offset = 0x4, fixed_abs, tag = 'smem constant byte address 0x4 - core index']
  #allocation1 [shape = 'u32[144,128]{1,0:T(1,128)}', space=vmem, size = 0x12000, scoped, tag = 'internal scratch']
  %s0 = inlined_call_operand.hbm [shape: f32[8,256], index: 0, kind: input, shape index: {}]
  %s1 = inlined_call_operand.hbm [shape: f32[8,128], index: 1, kind: input, shape index: {}]
  %s2 = inlined_call_operand.hbm [shape: f32[8,256], index: 2, kind: output, shape index: {}]
  %s3 = sld [smem:[#allocation0]]
  $region49: #{tpu_custom_call.1} parent=0
    _
  %s5 = ssub.s32 1, %s3
  %s6 = scalar_select 0, %s5, %s3
  $region1: #{tpu_custom_call.1} parent=0
    #allocation2 [shape = 'u8[8192]{0}', space=vmem, size = 0x2000, scoped, tag = 'input window, operand 0']
    #allocation3 [shape = 's32[2]{0}', space=sflag, size = 0x8, scoped, tag = 'scoped memory for tpu_custom_call.1']
    #allocation4 [shape = 's32[2]{0}', space=sflag, size = 0x8, scoped, tag = 'scoped memory for tpu_custom_call.1']
    #allocation5 [shape = 'u8[4096]{0}', space=vmem, size = 0x1000, scoped, tag = 'input window, operand 1, single buffered']
    #allocation6 [shape = 's32[1]{0}', space=sflag, size = 0x4, scoped, tag = 'scoped memory for tpu_custom_call.1']
    #allocation7 [shape = 'u8[8192]{0}', space=vmem, size = 0x2000, scoped, tag = 'output window, operand 0']
    %7 = vsyncpa [#allocation3], 0
    %s8 = scalar_lea.sflag [#allocation3], 1
    %9 = vsyncpa %s8, 0
    %10 = vsyncpa [#allocation6], 0
    %11 = vsyncpa [#allocation4], 0
    %s12 = scalar_lea.sflag [#allocation4], 1
    %13 = vsyncpa %s12, 0
    loop: start=0, step=1, limit=4
    $region2: #{tpu_custom_call.1} parent=1 // loop_pre_header
      _
    $region3: #{tpu_custom_call.1} parent=1 // loop_header
      %s15 = sphi 0, %s19
      %p16 = scmp.ge.s32.totalorder %s15, 4
      %s22 = sphi 0, %s34
      %s23 = sphi 0, %s30
      %s24 = sphi 0, %s22
      %s25 = sphi 0, %s23
      %s26 = sphi 0, %s24
      %s27 = sphi 0, %s25
      %s39 = sphi 0, %s41
      %s42 = sphi 0, %s39
      %s43 = sphi 0, %s42
      %s59 = sphi 0, %s43
      %s65 = sphi 0, %s67
      %s68 = sphi 0, %s65
      %s69 = sphi 0, %s68
      %s85 = sphi 0, %s69
      %s93 = sphi 0, %s95
      %s96 = sphi 0, %s93
      %s97 = sphi 0, %s96
      %s113 = sphi 0, %s97
    $region4: #{tpu_custom_call.1} parent=1 // loop_header_branch
      %18 = sbr.rel (%p16) target = $region8
    $region5: #{tpu_custom_call.1} parent=1 // loop_body
      %s20 = ssub.s32 %s15, 1
      %s21 = ssub.s32 %s15, 2
      %s28 = sadd.s32 1, %s23
      %p29 = scmp.ge.s32.totalorder %s28, 2
      %s30 = scalar_select %p29, 0, %s28
      %s31 = sadd.s32 1, %s22
      %s32 = scalar_select %p29, %s31, %s22
      %p33 = scmp.ge.s32.totalorder %s32, 1
      %s34 = scalar_select %p33, 0, %s32
      %s35 = ssub.s32 %s22, %s34
      %s36 = ssub.s32 %s23, %s30
      %s37 = sor.u32 %s35, %s36
      %p38 = scmp.eq.s32.totalorder %s37, 0
      %s40 = sadd.s32 %s39, 1
      %s41 = scalar_select %p38, %s39, %s40
      %p44 = pneg %p38
      %p45 = scmp.eq.s32.totalorder %s15, 1
      %p46 = por %p44, %p45
      %p47 = scmp.ne.s32.totalorder %s39, %s42
      %p48 = scmp.eq.s32.totalorder %s15, 0
      %p49 = por %p47, %p48
      %p50 = scmp.ne.s32.totalorder %s39, %s42
      %p51 = scmp.eq.s32.totalorder %s20, 1
      %p52 = por %p50, %p51
      %p53 = scmp.ne.s32.totalorder %s42, %s43
      %p54 = scmp.eq.s32.totalorder %s20, 0
      %p55 = por %p53, %p54
      %p56 = scmp.ne.s32.totalorder %s42, %s43
      %p57 = scmp.eq.s32.totalorder %s21, 1
      %p58 = por %p56, %p57
      %p60 = scmp.ne.s32.totalorder %s43, %s59
      %p61 = scmp.eq.s32.totalorder %s21, 0
      %p62 = por %p60, %p61
      %s63 = ssub.s32 %s22, %s34
      %p64 = scmp.eq.s32.totalorder %s63, 0
      %s66 = sadd.s32 %s65, 1
      %s67 = scalar_select %p64, %s65, %s66
      %p70 = pneg %p64
      %p71 = scmp.eq.s32.totalorder %s15, 1
      %p72 = por %p70, %p71
      %p73 = scmp.ne.s32.totalorder %s65, %s68
      %p74 = scmp.eq.s32.totalorder %s15, 0
      %p75 = por %p73, %p74
      %p76 = scmp.ne.s32.totalorder %s65, %s68
      %p77 = scmp.eq.s32.totalorder %s20, 1
      %p78 = por %p76, %p77
      %p79 = scmp.ne.s32.totalorder %s68, %s69
      %p80 = scmp.eq.s32.totalorder %s20, 0
      %p81 = por %p79, %p80
      %p82 = scmp.ne.s32.totalorder %s68, %s69
      %p83 = scmp.eq.s32.totalorder %s21, 1
      %p84 = por %p82, %p83
      %p86 = scmp.ne.s32.totalorder %s69, %s85
      %p87 = scmp.eq.s32.totalorder %s21, 0
      %p88 = por %p86, %p87
      %s89 = ssub.s32 %s22, %s34
      %s90 = ssub.s32 %s23, %s30
      %s91 = sor.u32 %s89, %s90
      %p92 = scmp.eq.s32.totalorder %s91, 0
      %s94 = sadd.s32 %s93, 1
      %s95 = scalar_select %p92, %s93, %s94
      %p98 = pneg %p92
      %p99 = scmp.eq.s32.totalorder %s15, 1
      %p100 = por %p98, %p99
      %p101 = scmp.ne.s32.totalorder %s93, %s96
      %p102 = scmp.eq.s32.totalorder %s15, 0
      %p103 = por %p101, %p102
      %p104 = scmp.ne.s32.totalorder %s93, %s96
      %p105 = scmp.eq.s32.totalorder %s20, 1
      %p106 = por %p104, %p105
      %p107 = scmp.ne.s32.totalorder %s96, %s97
      %p108 = scmp.eq.s32.totalorder %s20, 0
      %p109 = por %p107, %p108
      %p110 = scmp.ne.s32.totalorder %s96, %s97
      %p111 = scmp.eq.s32.totalorder %s21, 1
      %p112 = por %p110, %p111
      %p114 = scmp.ne.s32.totalorder %s97, %s113
      %p115 = scmp.eq.s32.totalorder %s21, 0
      %p116 = por %p114, %p115
      %p117 = scmp.le.s32.totalorder 1, %s15
      %p118 = scmp.lt.s32.totalorder %s15, 3
      %p119 = pnand %p117, %p118
      %p120 = pneg %p119
      // Predicated region
      $region9: #{tpu_custom_call.1} parent=5 // pred_check
        _
      $region10: #{tpu_custom_call.1} parent=5 // pred_check_branch
        %122 = sbr.rel (%p119) target = $region12
      $region11: #{tpu_custom_call.1} parent=5 // pred_region
        %s123 = ssub.s32 %s15, 1
        // Predicated region
        $region13: #{tpu_custom_call.1} parent=11 // pred_check
          %p124 = pneg %p81
        $region14: #{tpu_custom_call.1} parent=11 // pred_check_branch
          %126 = sbr.rel (%p124) target = $region16
        $region15: #{tpu_custom_call.1} parent=11 // pred_region
          %s128 = ssub.s32 128, 128
          %129 = vsyncadd [#allocation6], %s128
          %s130 = smul.addr %s24, 128
          %s131 = scalar_lea.hbm %s1, %s130
          %s133 = sshll.u32 [#allocation5], 4
          %s134 = int_to_ptr.vmem [resolvable:$true] %s133
          %136 = dma.hbm_to_vmem [thread:$0]  %s131, 128, %s134, [#allocation6]
        $region16: #{tpu_custom_call.1} parent=11 // pred_fallthru
          _
      $region12: #{tpu_custom_call.1} parent=5 // pred_fallthru
        _
      %p137 = scmp.lt.s32.totalorder %s15, 2
      // Predicated region
      $region17: #{tpu_custom_call.1} parent=5 // pred_check
        %p138 = pneg %p137
      $region18: #{tpu_custom_call.1} parent=5 // pred_check_branch
        %140 = sbr.rel (%p138) target = $region20
      $region19: #{tpu_custom_call.1} parent=5 // pred_region
        // Predicated region
        $region21: #{tpu_custom_call.1} parent=19 // pred_check
          %p141 = pneg %p49
        $region22: #{tpu_custom_call.1} parent=19 // pred_check_branch
          %143 = sbr.rel (%p141) target = $region24
        $region23: #{tpu_custom_call.1} parent=19 // pred_region
          %s144 = sand.u32 %s39, 1
          %s145 = scalar_lea.sflag [#allocation3], %s144
          %s146 = sand.u32 %s39, 1
          %s147 = smul.addr %s146, 8
          %s148 = scalar_lea.vmem [#allocation2], %s147
          %s150 = ssub.s32 128, 128
          %151 = vsyncadd %s145, %s150
          %s152 = smul.addr %s22, 2
          %s153 = sadd.s32 %s23, %s152
          %s154 = smul.addr %s153, 128
          %s155 = scalar_lea.hbm %s0, %s154
          %s157 = sshll.u32 %s148, 4
          %s158 = int_to_ptr.vmem [resolvable:$true] %s157
          %160 = dma.hbm_to_vmem [thread:$0]  %s155, 128, %s158, %s145
        $region24: #{tpu_custom_call.1} parent=19 // pred_fallthru
          _
      $region20: #{tpu_custom_call.1} parent=5 // pred_fallthru
        _
      %p161 = scmp.le.s32.totalorder 1, %s15
      %p162 = scmp.lt.s32.totalorder %s15, 3
      %p163 = pnand %p161, %p162
      %p164 = pneg %p163
      // Predicated region
      $region25: #{tpu_custom_call.1} parent=5 // pred_check
        _
      $region26: #{tpu_custom_call.1} parent=5 // pred_check_branch
        %166 = sbr.rel (%p163) target = $region28
      $region27: #{tpu_custom_call.1} parent=5 // pred_region
        %s167 = ssub.s32 %s15, 1
        %s168 = sand.u32 %s42, 1
        %s169 = scalar_lea.sflag [#allocation3], %s168
        %s170 = sand.u32 %s42, 1
        %s171 = smul.addr %s170, 8
        %s172 = scalar_lea.vmem [#allocation2], %s171
        // Predicated region
        $region29: #{tpu_custom_call.1} parent=27 // pred_check
          %p173 = pneg %p55
        $region30: #{tpu_custom_call.1} parent=27 // pred_check_branch
          %175 = sbr.rel (%p173) target = $region32
        $region31: #{tpu_custom_call.1} parent=27 // pred_region
          %176 = dma.done %s169, 128
        $region32: #{tpu_custom_call.1} parent=27 // pred_fallthru
          _
        // Predicated region
        $region33: #{tpu_custom_call.1} parent=27 // pred_check
          %p177 = pneg %p81
        $region34: #{tpu_custom_call.1} parent=27 // pred_check_branch
          %179 = sbr.rel (%p177) target = $region36
        $region35: #{tpu_custom_call.1} parent=27 // pred_region
          %180 = dma.done [#allocation6], 128
        $region36: #{tpu_custom_call.1} parent=27 // pred_fallthru
          _
        %s181 = sand.u32 %s42, 1
        %s182 = scalar_lea.sflag [#allocation3], %s181
        %s183 = sand.u32 %s42, 1
        %s184 = smul.addr %s183, 8
        %s185 = scalar_lea.vmem [#allocation2], %s184
        %p186 = pneg %p55
        %p187 = pneg %p52
        %p188 = pneg %p81
        %p189 = pneg %p78
        %p190 = pneg %p109
        %p191 = pneg %p106
        %s192 = sand.u32 %s96, 1
        %s193 = scalar_lea.sflag [#allocation4], %s192
        %s194 = sand.u32 %s96, 1
        %s195 = smul.addr %s194, 8
        %s196 = scalar_lea.vmem [#allocation7], %s195
        %v197 = vld [vmem:[%s172] sm:$0xff]
        %v198 = vld [vmem:[#allocation5] sm:$0xff]
        %v199 = vadd.f32 %v197, %v198
        %200 = vst [vmem:[%s196] sm:$0xff] %v199
        %s201 = sand.u32 %s96, 1
        %s202 = scalar_lea.sflag [#allocation4], %s201
        %s203 = sand.u32 %s96, 1
        %s204 = smul.addr %s203, 8
        %s205 = scalar_lea.vmem [#allocation7], %s204
        // Predicated region
        $region37: #{tpu_custom_call.1} parent=27 // pred_check
          %p206 = pneg %p106
        $region38: #{tpu_custom_call.1} parent=27 // pred_check_branch
          %208 = sbr.rel (%p206) target = $region40
        $region39: #{tpu_custom_call.1} parent=27 // pred_region
          %s210 = ssub.s32 128, 128
          %211 = vsyncadd %s202, %s210
          %s212 = smul.addr %s24, 2
          %s213 = sadd.s32 %s25, %s212
          %s214 = smul.addr %s213, 128
          %s215 = scalar_lea.hbm %s2, %s214
          %s217 = sshll.u32 %s205, 4
          %s218 = int_to_ptr.vmem [resolvable:$true] %s217
          %220 = dma.vmem_to_hbm [thread:$0]  %s218, 128, %s215, %s202
        $region40: #{tpu_custom_call.1} parent=27 // pred_fallthru
          _
      $region28: #{tpu_custom_call.1} parent=5 // pred_fallthru
        _
      %p221 = scmp.le.s32.totalorder 2, %s15
      // Predicated region
      $region41: #{tpu_custom_call.1} parent=5 // pred_check
        %p222 = pneg %p221
      $region42: #{tpu_custom_call.1} parent=5 // pred_check_branch
        %224 = sbr.rel (%p222) target = $region44
      $region43: #{tpu_custom_call.1} parent=5 // pred_region
        %s225 = ssub.s32 %s15, 2
        // Predicated region
        $region45: #{tpu_custom_call.1} parent=43 // pred_check
          %p226 = pneg %p112
        $region46: #{tpu_custom_call.1} parent=43 // pred_check_branch
          %228 = sbr.rel (%p226) target = $region48
        $region47: #{tpu_custom_call.1} parent=43 // pred_region
          %s229 = sand.u32 %s97, 1
          %s230 = scalar_lea.sflag [#allocation4], %s229
          %s231 = sand.u32 %s97, 1
          %s232 = smul.addr %s231, 8
          %s233 = scalar_lea.vmem [#allocation7], %s232
          %234 = dma.done %s230, 128
        $region48: #{tpu_custom_call.1} parent=43 // pred_fallthru
          _
      $region44: #{tpu_custom_call.1} parent=5 // pred_fallthru
        _
    $region6: #{tpu_custom_call.1} parent=1 // loop_footer
      %s19 = sadd.s32 1, %s15
    $region7: #{tpu_custom_call.1} parent=1 // loop_footer_branch
      %14 = sbr.rel target = $region3
    $region8: #{tpu_custom_call.1} parent=1 // loop_exit
      _
    %235 = vsyncpa [#allocation3], 1
    %s236 = scalar_lea.sflag [#allocation3], 1
    %237 = vsyncpa %s236, 1
    %238 = vsyncpa [#allocation6], 1
    %239 = vsyncpa [#allocation4], 1
    %s240 = scalar_lea.sflag [#allocation4], 1
    %241 = vsyncpa %s240, 1

</llo_original>
